<compile_context>
chip_gen: v6e
topology: v6e:2x2x1
jax: 0.10.0
libtpu: 0.0.40
codegen_flags: <defaults>
</compile_context>

<pallas_src>
import functools

import jax
import jax.numpy as jnp
from jax.experimental import pallas as pl
from jax.experimental.pallas import tpu as pltpu


def _round_up(n, m):
    return ((n + m - 1) // m) * m


def ffn_kernel(x_ref, w1_ref, b1_ref, w2_ref, b2_ref, o_ref, acc_ref):
    # x_ref : (TM, Dp)      compute dtype
    # w1_ref: (Dp, TF)      compute dtype
    # b1_ref: (1, TF)       f32
    # w2_ref: (TF, Dp)      compute dtype
    # b2_ref: (1, Dp)       f32
    # o_ref : (TM, Dp)      output dtype
    # acc_ref: (TM, Dp)     f32 scratch, resident across the k (d_ff) axis
    k = pl.program_id(1)

    @pl.when(k == 0)
    def _():
        # Seed the accumulator with the output bias (f32).
        acc_ref[...] = jnp.broadcast_to(b2_ref[...], acc_ref.shape)

    # First matmul on the MXU (f32 accumulation); bias add + ReLU on the VPU.
    h = jnp.dot(x_ref[...], w1_ref[...], preferred_element_type=jnp.float32)
    h = jnp.maximum(h + b1_ref[...], 0.0)

    # TODO(synk): training-mode dropout (pltpu.prng_seed / prng_random_bits
    # mask) is not implemented; inference-mode dropout is identity.

    # Second matmul: cast the f32 intermediate to the MXU operand dtype only
    # for the multiply; accumulation stays f32 in the scratch.
    acc_ref[...] += jnp.dot(h.astype(w2_ref.dtype), w2_ref[...],
                            preferred_element_type=jnp.float32)

    @pl.when(k == pl.num_programs(1) - 1)
    def _():
        o_ref[...] = acc_ref[...].astype(o_ref.dtype)


def _vmem_bytes(tm, tf, d_model_p, isz, osz):
    return (2 * tm * d_model_p * isz          # x tile (double buffered)
            + 2 * tm * d_model_p * osz        # out tile (double buffered)
            + 2 * d_model_p * tf * isz        # w1 tile
            + 2 * tf * 4                      # b1 tile
            + 2 * tf * d_model_p * isz        # w2 tile
            + 2 * d_model_p * 4               # b2
            + tm * d_model_p * 4              # f32 accumulator scratch
            + tm * tf * 4)                    # f32 intermediate h


def _pick_tiles(rows, d_ff, d_model_p, tile_rows, tile_ff, isz, osz,
                budget=28 << 20):
    """Biggest (row, d_ff) tiles whose working set fits under `budget`."""
    tm = _round_up(min(tile_rows, _round_up(rows, 8)), 8)
    tf = _round_up(min(tile_ff, _round_up(d_ff, 128)), 128)
    while _vmem_bytes(tm, tf, d_model_p, isz, osz) > budget:
        if tf >= tm and tf > 256:
            tf = max(256, _round_up(tf // 2, 128))
        elif tm > 128:
            tm = max(128, _round_up(tm // 2, 8))
        else:
            break
    return tm, tf


@functools.partial(jax.jit, static_argnames=("tile_rows", "tile_ff", "compute_dtype"))
def positionwise_feed_forward(x, w1, b1, w2, b2, *,
                              tile_rows=512, tile_ff=1024, compute_dtype=None):
    """x: (batch, seq, d_model) -> (batch, seq, d_model).

    w1: (d_model, d_ff), b1: (d_ff,), w2: (d_ff, d_model), b2: (d_model,)
    (weights stored pre-transposed for row-major x @ W).
    compute_dtype: dtype fed to the MXU (e.g. jnp.bfloat16); None -> x.dtype.
    """
    batch, seq, d_model = x.shape
    d_ff = w1.shape[1]
    out_dtype = x.dtype
    cdt = jnp.dtype(compute_dtype) if compute_dtype is not None else jnp.dtype(x.dtype)
    isz = cdt.itemsize
    osz = jnp.dtype(out_dtype).itemsize

    rows = batch * seq

    # ---- padded / tiled geometry ------------------------------------------
    d_model_p = _round_up(d_model, 128)               # lane-dense K / N dims
    tm, tf = _pick_tiles(rows, d_ff, d_model_p, tile_rows, tile_ff, isz, osz)
    rows_p = _round_up(rows, tm)
    d_ff_p = _round_up(_round_up(d_ff, 128), tf)

    # ---- pad / cast operands only when needed (zero pad keeps math exact) --
    x2 = x.reshape(rows, d_model)
    if (rows_p, d_model_p) != (rows, d_model):
        x2 = jnp.pad(x2, ((0, rows_p - rows), (0, d_model_p - d_model)))
    if x2.dtype != cdt:
        x2 = x2.astype(cdt)

    w1_p = w1 if (d_model_p, d_ff_p) == (d_model, d_ff) else jnp.pad(
        w1, ((0, d_model_p - d_model), (0, d_ff_p - d_ff)))
    w2_p = w2 if (d_ff_p, d_model_p) == (d_ff, d_model) else jnp.pad(
        w2, ((0, d_ff_p - d_ff), (0, d_model_p - d_model)))
    if w1_p.dtype != cdt:
        w1_p = w1_p.astype(cdt)
    if w2_p.dtype != cdt:
        w2_p = w2_p.astype(cdt)

    b1_p = (b1 if d_ff_p == d_ff else jnp.pad(b1, (0, d_ff_p - d_ff)))
    b2_p = (b2 if d_model_p == d_model else jnp.pad(b2, (0, d_model_p - d_model)))
    b1_p = b1_p.astype(jnp.float32).reshape(1, d_ff_p)
    b2_p = b2_p.astype(jnp.float32).reshape(1, d_model_p)

    # ---- compiler hints ----------------------------------------------------
    vmem_bytes = _vmem_bytes(tm, tf, d_model_p, isz, osz)
    vmem_limit = min(int(vmem_bytes * 1.25) + (2 << 20), 60 << 20)

    cost = pl.CostEstimate(
        flops=4 * rows_p * d_model_p * d_ff_p,        # two matmuls
        transcendentals=0,
        bytes_accessed=(rows_p * d_model_p * (isz + osz)
                        + 2 * d_model_p * d_ff_p * isz
                        + (d_ff_p + d_model_p) * 4))

    grid = (rows_p // tm, d_ff_p // tf)               # d_ff reduction innermost

    out = pl.pallas_call(
        ffn_kernel,
        out_shape=jax.ShapeDtypeStruct((rows_p, d_model_p), out_dtype),
        grid_spec=pltpu.PrefetchScalarGridSpec(
            num_scalar_prefetch=0,
            grid=grid,
            in_specs=[
                pl.BlockSpec((tm, d_model_p), lambda i, k: (i, 0)),   # x
                pl.BlockSpec((d_model_p, tf), lambda i, k: (0, k)),   # w1
                pl.BlockSpec((1, tf),         lambda i, k: (0, k)),   # b1
                pl.BlockSpec((tf, d_model_p), lambda i, k: (k, 0)),   # w2
                pl.BlockSpec((1, d_model_p),  lambda i, k: (0, 0)),   # b2
            ],
            out_specs=pl.BlockSpec((tm, d_model_p), lambda i, k: (i, 0)),
            scratch_shapes=[pltpu.VMEM((tm, d_model_p), jnp.float32)],
        ),
        compiler_params=pltpu.CompilerParams(
            dimension_semantics=("parallel", "arbitrary"),
            vmem_limit_bytes=vmem_limit,
        ),
        cost_estimate=cost,
    )(x2, w1_p, b1_p, w2_p, b2_p)

    if (rows_p, d_model_p) != (rows, d_model):
        out = out[:rows, :d_model]
    return out.reshape(batch, seq, d_model)


if __name__ == "__main__":
    # Small shapes consistent with the module: batch=2, seq=8, d_model=32, d_ff=64
    batch, seq, d_model, d_ff = 2, 8, 32, 64
    key = jax.random.PRNGKey(0)
    kx, kw1, kb1, kw2, kb2 = jax.random.split(key, 5)

    x = jax.random.normal(kx, (batch, seq, d_model), dtype=jnp.float32)
    # nn.Linear(d_model, d_ff): weight (d_ff, d_model), bias (d_ff,);
    # stored pre-transposed for row-major x @ W.
    w1 = jax.random.normal(kw1, (d_model, d_ff), dtype=jnp.float32) * 0.1
    b1 = jax.random.normal(kb1, (d_ff,), dtype=jnp.float32) * 0.1
    w2 = jax.random.normal(kw2, (d_ff, d_model), dtype=jnp.float32) * 0.1
    b2 = jax.random.normal(kb2, (d_model,), dtype=jnp.float32) * 0.1

    # Pure-JAX reference (inference-mode dropout == identity).
    y_ref = jnp.maximum(x @ w1 + b1, 0.0) @ w2 + b2

    # f32 path (matches the PyTorch reference tightly).
    y = positionwise_feed_forward(x, w1, b1, w2, b2)
    y = jax.block_until_ready(y)
    assert y.shape == x.shape, f"bad shape {y.shape}"
    assert jnp.allclose(y, y_ref, atol=1e-4, rtol=1e-4), "f32 mismatch vs reference"

    # bf16-MXU path (f32 accumulation; standard precision trade, loose tolerance).
    y_bf = positionwise_feed_forward(x, w1, b1, w2, b2, compute_dtype=jnp.bfloat16)
    y_bf = jax.block_until_ready(y_bf)
    assert jnp.allclose(y_bf, y_ref, atol=1e-1, rtol=1e-1), "bf16 mismatch vs reference"

    # A larger, fully-aligned case (no wrapper-side padding / casts) to
    # exercise the multi-tile row + d_ff-reduction path.
    kx2 = jax.random.split(key, 6)[-1]
    x_l = jax.random.normal(kx2, (4, 256, 512), dtype=jnp.float32)
    w1_l = jax.random.normal(kw1, (512, 2048), dtype=jnp.float32) * 0.02
    b1_l = jax.random.normal(kb1, (2048,), dtype=jnp.float32) * 0.02
    w2_l = jax.random.normal(kw2, (2048, 512), dtype=jnp.float32) * 0.02
    b2_l = jax.random.normal(kb2, (512,), dtype=jnp.float32) * 0.02
    y_l = positionwise_feed_forward(x_l, w1_l, b1_l, w2_l, b2_l)
    y_l = jax.block_until_ready(y_l)
    y_l_ref = jnp.maximum(x_l @ w1_l + b1_l, 0.0) @ w2_l + b2_l
    assert jnp.allclose(y_l, y_l_ref, atol=1e-3, rtol=1e-3), "large-case mismatch"

    print("KERNEL_OK")
</pallas_src>

<mosaic_0001>
module attributes {stable_mosaic.version = 11 : i64} {
  func.func @ffn_kernel(%arg0: i32, %arg1: i32, %arg2: memref<16x128xf32, #tpu.memory_space<vmem>>, %arg3: memref<128x128xf32, #tpu.memory_space<vmem>>, %arg4: memref<1x128xf32, #tpu.memory_space<vmem>>, %arg5: memref<128x128xf32, #tpu.memory_space<vmem>>, %arg6: memref<1x128xf32, #tpu.memory_space<vmem>>, %arg7: memref<16x128xf32, #tpu.memory_space<vmem>>, %arg8: memref<16x128xf32, #tpu.memory_space<vmem>>) attributes {dimension_semantics = [#tpu.dimension_semantics<parallel>, #tpu.dimension_semantics<arbitrary>], iteration_bounds = array<i64: 1, 1>, scalar_prefetch = 0 : i64, scratch_operands = 1 : i64, tpu.core_type = #tpu.core_type<tc>, window_params = [{transform_indices = @transform_0, window_bounds = array<i64: 16, 128>}, {transform_indices = @transform_1, window_bounds = array<i64: 128, 128>}, {transform_indices = @transform_2, window_bounds = array<i64: 1, 128>}, {transform_indices = @transform_3, window_bounds = array<i64: 128, 128>}, {pipeline_mode = #tpu.pipeline_mode<synchronous>, transform_indices = @transform_4, window_bounds = array<i64: 1, 128>}, {transform_indices = @transform_5, window_bounds = array<i64: 16, 128>}]} {
    %c0_i32 = arith.constant 0 : i32
    %0 = arith.cmpi eq, %arg1, %c0_i32 : i32
    %1 = arith.extui %0 : i1 to i32
    %c0_i32_0 = arith.constant 0 : i32
    %2 = arith.cmpi ne, %1, %c0_i32_0 : i32
    scf.if %2 {
      %c0_16 = arith.constant 0 : index
      %c0_17 = arith.constant 0 : index
      %19 = vector.load %arg6[%c0_16, %c0_17] : memref<1x128xf32, #tpu.memory_space<vmem>>, vector<1x128xf32>
      %20 = vector.shape_cast %19 : vector<1x128xf32> to vector<1x128xf32>
      %21 = vector.broadcast %20 : vector<1x128xf32> to vector<16x128xf32>
      %c0_18 = arith.constant 0 : index
      %c0_19 = arith.constant 0 : index
      %22 = vector.load %arg8[%c0_18, %c0_19] : memref<16x128xf32, #tpu.memory_space<vmem>>, vector<16x128xf32>
      tpu.vector_store %arg8[%c0_18, %c0_19], %21 {strides = array<i32>} : memref<16x128xf32, #tpu.memory_space<vmem>>, vector<16x128xf32>,
    } else {
    }
    %c0 = arith.constant 0 : index
    %c0_1 = arith.constant 0 : index
    %3 = vector.load %arg2[%c0, %c0_1] : memref<16x128xf32, #tpu.memory_space<vmem>>, vector<16x128xf32>
    %c0_2 = arith.constant 0 : index
    %c0_3 = arith.constant 0 : index
    %4 = vector.load %arg3[%c0_2, %c0_3] : memref<128x128xf32, #tpu.memory_space<vmem>>, vector<128x128xf32>
    %cst = arith.constant dense<0.000000e+00> : vector<16x128xf32>
    %5 = tpu.matmul %3, %4, %cst {dimension_numbers = #tpu.dot_dimension_numbers<[1], [0], [0], [1], [0, 0, 1, 1], [], []>} : vector<16x128xf32>, vector<128x128xf32>, vector<16x128xf32> -> vector<16x128xf32>
    %c0_4 = arith.constant 0 : index
    %c0_5 = arith.constant 0 : index
    %6 = vector.load %arg4[%c0_4, %c0_5] : memref<1x128xf32, #tpu.memory_space<vmem>>, vector<1x128xf32>
    %7 = vector.broadcast %6 : vector<1x128xf32> to vector<16x128xf32>
    %8 = arith.addf %5, %7 : vector<16x128xf32>
    %cst_6 = arith.constant 0.000000e+00 : f32
    %9 = vector.broadcast %cst_6 : f32 to vector<16x128xf32>
    %10 = arith.maximumf %8, %9 : vector<16x128xf32>
    %c0_7 = arith.constant 0 : index
    %c0_8 = arith.constant 0 : index
    %11 = vector.load %arg8[%c0_7, %c0_8] : memref<16x128xf32, #tpu.memory_space<vmem>>, vector<16x128xf32>
    %c0_9 = arith.constant 0 : index
    %c0_10 = arith.constant 0 : index
    %12 = vector.load %arg5[%c0_9, %c0_10] : memref<128x128xf32, #tpu.memory_space<vmem>>, vector<128x128xf32>
    %cst_11 = arith.constant dense<0.000000e+00> : vector<16x128xf32>
    %13 = tpu.matmul %10, %12, %cst_11 {dimension_numbers = #tpu.dot_dimension_numbers<[1], [0], [0], [1], [0, 0, 1, 1], [], []>} : vector<16x128xf32>, vector<128x128xf32>, vector<16x128xf32> -> vector<16x128xf32>
    %14 = arith.addf %11, %13 : vector<16x128xf32>
    %c0_12 = arith.constant 0 : index
    %c0_13 = arith.constant 0 : index
    %15 = vector.load %arg8[%c0_12, %c0_13] : memref<16x128xf32, #tpu.memory_space<vmem>>, vector<16x128xf32>
    tpu.vector_store %arg8[%c0_12, %c0_13], %14 {strides = array<i32>} : memref<16x128xf32, #tpu.memory_space<vmem>>, vector<16x128xf32>,
    %c0_i32_14 = arith.constant 0 : i32
    %16 = arith.cmpi eq, %arg1, %c0_i32_14 : i32
    %17 = arith.extui %16 : i1 to i32
    %c0_i32_15 = arith.constant 0 : i32
    %18 = arith.cmpi ne, %17, %c0_i32_15 : i32
    scf.if %18 {
      %c0_16 = arith.constant 0 : index
      %c0_17 = arith.constant 0 : index
      %19 = vector.load %arg8[%c0_16, %c0_17] : memref<16x128xf32, #tpu.memory_space<vmem>>, vector<16x128xf32>
      %c0_18 = arith.constant 0 : index
      %c0_19 = arith.constant 0 : index
      %20 = vector.load %arg7[%c0_18, %c0_19] : memref<16x128xf32, #tpu.memory_space<vmem>>, vector<16x128xf32>
      tpu.vector_store %arg7[%c0_18, %c0_19], %19 {strides = array<i32>} : memref<16x128xf32, #tpu.memory_space<vmem>>, vector<16x128xf32>,
    } else {
    }
    return
  }
  func.func @transform_0(%arg0: i32, %arg1: i32) -> (i32, i32) {
    %c0_i32 = arith.constant 0 : i32
    %c0_i32_0 = arith.constant 0 : i32
    return %arg0, %c0_i32 : i32, i32
  }
  func.func @transform_1(%arg0: i32, %arg1: i32) -> (i32, i32) {
    %c0_i32 = arith.constant 0 : i32
    %c0_i32_0 = arith.constant 0 : i32
    return %c0_i32, %arg1 : i32, i32
  }
  func.func @transform_2(%arg0: i32, %arg1: i32) -> (i32, i32) {
    %c0_i32 = arith.constant 0 : i32
    %c0_i32_0 = arith.constant 0 : i32
    return %c0_i32, %arg1 : i32, i32
  }
  func.func @transform_3(%arg0: i32, %arg1: i32) -> (i32, i32) {
    %c0_i32 = arith.constant 0 : i32
    %c0_i32_0 = arith.constant 0 : i32
    return %arg1, %c0_i32 : i32, i32
  }
  func.func @transform_4(%arg0: i32, %arg1: i32) -> (i32, i32) {
    %c0_i32 = arith.constant 0 : i32
    %c0_i32_0 = arith.constant 0 : i32
    %c0_i32_1 = arith.constant 0 : i32
    return %c0_i32, %c0_i32_0 : i32, i32
  }
  func.func @transform_5(%arg0: i32, %arg1: i32) -> (i32, i32) {
    %c0_i32 = arith.constant 0 : i32
    %c0_i32_0 = arith.constant 0 : i32
    return %arg0, %c0_i32 : i32, i32
  }
}

</mosaic_0001>

<llo_original>
// kernel: positionwise_feed_forward.1
$region0: #{positionwise_feed_forward.1}
  #allocation0 [shape = 'u32[]', space=smem, size = 0x4, offset = 0x4, fixed_abs, tag = 'smem constant byte address 0x4 - core index']
  #allocation1 [shape = 'u32[144,128]{1,0:T(1,128)}', space=vmem, size = 0x12000, scoped, tag = 'internal scratch']
  #allocation2 [shape = 'f32[16,128]{1,0:T(8,128)}', space=vmem, size = 0x2000, scoped, tag = 'scratch operand']
  %s0 = inlined_call_operand.vmem [shape: f32[16,128], index: 0, kind: input, shape index: {}]
  %s1 = inlined_call_operand.vmem [shape: f32[128,128], index: 1, kind: input, shape index: {}]
  %s2 = inlined_call_operand.vmem [shape: f32[1,128], index: 2, kind: input, shape index: {}]
  %s3 = inlined_call_operand.vmem [shape: f32[128,128], index: 3, kind: input, shape index: {}]
  %s4 = inlined_call_operand.vmem [shape: f32[1,128], index: 4, kind: input, shape index: {}]
  %s5 = inlined_call_operand.vmem [shape: f32[16,128], index: 5, kind: output, shape index: {}]
  %s6 = sld [smem:[#allocation0]]
  $region38: #{positionwise_feed_forward.1} parent=0
    _
  %s8 = ssub.s32 1, %s6
  %s9 = scalar_select 0, %s8, %s6
  // Predicated region
  $region2: #{positionwise_feed_forward.1} parent=0 // pred_check
    _
  $region3: #{positionwise_feed_forward.1} parent=0 // pred_check_branch
    %11 = sbr.rel (0) target = $region5
  $region4: #{positionwise_feed_forward.1} parent=0 // pred_region
    _
  $region5: #{positionwise_feed_forward.1} parent=0 // pred_fallthru
    _
  // Predicated region
  $region6: #{positionwise_feed_forward.1} parent=0 // pred_check
    _
  $region7: #{positionwise_feed_forward.1} parent=0 // pred_check_branch
    %13 = sbr.rel (0) target = $region9
  $region8: #{positionwise_feed_forward.1} parent=0 // pred_region
    _
  $region9: #{positionwise_feed_forward.1} parent=0 // pred_fallthru
    _
  // Predicated region
  $region10: #{positionwise_feed_forward.1} parent=0 // pred_check
    _
  $region11: #{positionwise_feed_forward.1} parent=0 // pred_check_branch
    %15 = sbr.rel (0) target = $region13
  $region12: #{positionwise_feed_forward.1} parent=0 // pred_region
    _
  $region13: #{positionwise_feed_forward.1} parent=0 // pred_fallthru
    _
  // Predicated region
  $region14: #{positionwise_feed_forward.1} parent=0 // pred_check
    _
  $region15: #{positionwise_feed_forward.1} parent=0 // pred_check_branch
    %17 = sbr.rel (0) target = $region17
  $region16: #{positionwise_feed_forward.1} parent=0 // pred_region
    _
  $region17: #{positionwise_feed_forward.1} parent=0 // pred_fallthru
    _
  // Predicated region
  $region18: #{positionwise_feed_forward.1} parent=0 // pred_check
    _
  $region19: #{positionwise_feed_forward.1} parent=0 // pred_check_branch
    %19 = sbr.rel (0) target = $region21
  $region20: #{positionwise_feed_forward.1} parent=0 // pred_region
    _
  $region21: #{positionwise_feed_forward.1} parent=0 // pred_fallthru
    _
  %p20 = scmp.eq.s32.totalorder 0, 0
  // Predicated region
  $region22: #{positionwise_feed_forward.1} parent=0 // pred_check
    %p21 = pneg %p20
  $region23: #{positionwise_feed_forward.1} parent=0 // pred_check_branch
    %23 = sbr.rel (%p21) target = $region25
  $region24: #{positionwise_feed_forward.1} parent=0 // pred_region
    %v24 = vld [vmem:[%s4] sm:$0x1]
    %v26 = vlaneseq
    %v27 = vshrl.u32 %v26, 7
    %v28 = vsub.s32 0, %v27
    %v29 = vrot.slane %v24, %v28
    %31 = vst [vmem:[#allocation2] sm:$0xff] %v29
    %32 = vst [vmem:[#allocation2 + $0x8] sm:$0xff] %v29
  $region25: #{positionwise_feed_forward.1} parent=0 // pred_fallthru
    _
  %v33 = vld [vmem:[%s0] sm:$0xff]
  %v34 = vld [vmem:[%s0 + $0x8] sm:$0xff]
  %v35 = vld [vmem:[%s1] sm:$0xff]
  %v36 = vld [vmem:[%s1 + $0x8] sm:$0xff]
  %v37 = vld [vmem:[%s1 + $0x10] sm:$0xff]
  %v38 = vld [vmem:[%s1 + $0x18] sm:$0xff]
  %v39 = vld [vmem:[%s1 + $0x20] sm:$0xff]
  %v40 = vld [vmem:[%s1 + $0x28] sm:$0xff]
  %v41 = vld [vmem:[%s1 + $0x30] sm:$0xff]
  %v42 = vld [vmem:[%s1 + $0x38] sm:$0xff]
  %v43 = vld [vmem:[%s1 + $0x40] sm:$0xff]
  %v44 = vld [vmem:[%s1 + $0x48] sm:$0xff]
  %v45 = vld [vmem:[%s1 + $0x50] sm:$0xff]
  %v46 = vld [vmem:[%s1 + $0x58] sm:$0xff]
  %v47 = vld [vmem:[%s1 + $0x60] sm:$0xff]
  %v48 = vld [vmem:[%s1 + $0x68] sm:$0xff]
  %v49 = vld [vmem:[%s1 + $0x70] sm:$0xff]
  %v50 = vld [vmem:[%s1 + $0x78] sm:$0xff]
  %v51 = vld [vmem:[%s2] sm:$0x1]
  %v53 = vlaneseq
  %v54 = vshrl.u32 %v53, 7
  %v55 = vsub.s32 0, %v54
  %v56 = vrot.slane %v51, %v55
  %58 = vmatprep.subr.mxu0 0.0
  %59 = vmatpush1.msra.mxu0 %v50
  %60 = vmatprep.subr.mxu0 0.0
  %61 = vmatpush1.msra.mxu0 %v49
  %62 = vmatprep.subr.mxu0 0.0
  %63 = vmatpush1.msra.mxu0 %v48
  %64 = vmatprep.subr.mxu0 0.0
  %65 = vmatpush1.msra.mxu0 %v47
  %66 = vmatprep.subr.mxu0 0.0
  %67 = vmatpush1.msra.mxu0 %v46
  %68 = vmatprep.subr.mxu0 0.0
  %69 = vmatpush1.msra.mxu0 %v45
  %70 = vmatprep.subr.mxu0 0.0
  %71 = vmatpush1.msra.mxu0 %v44
  %72 = vmatprep.subr.mxu0 0.0
  %73 = vmatpush1.msra.mxu0 %v43
  %74 = vmatprep.subr.mxu0 0.0
  %75 = vmatpush1.msra.mxu0 %v42
  %76 = vmatprep.subr.mxu0 0.0
  %77 = vmatpush1.msra.mxu0 %v41
  %78 = vmatprep.subr.mxu0 0.0
  %79 = vmatpush1.msra.mxu0 %v40
  %80 = vmatprep.subr.mxu0 0.0
  %81 = vmatpush1.msra.mxu0 %v39
  %82 = vmatprep.subr.mxu0 0.0
  %83 = vmatpush1.msra.mxu0 %v38
  %84 = vmatprep.subr.mxu0 0.0
  %85 = vmatpush1.msra.mxu0 %v37
  %86 = vmatprep.subr.mxu0 0.0
  %87 = vmatpush1.msra.mxu0 %v36
  %88 = vmatprep.subr.mxu0 0.0
  %89 = vmatpush1.msra.mxu0 %v35
  %90 = vmatprep.subr.mxu0 0.0
  %91 = vmatpush2.msra.mxu0 0.0
  %92 = vmatprep.subr.mxu0 0.0
  %93 = vmatpush2.msra.mxu0 0.0
  %94 = vmatprep.subr.mxu0 0.0
  %95 = vmatpush2.msra.mxu0 0.0
  %96 = vmatprep.subr.mxu0 0.0
  %97 = vmatpush2.msra.mxu0 0.0
  %98 = vmatprep.subr.mxu0 0.0
  %99 = vmatpush2.msra.mxu0 0.0
  %100 = vmatprep.subr.mxu0 0.0
  %101 = vmatpush2.msra.mxu0 0.0
  %102 = vmatprep.subr.mxu0 0.0
  %103 = vmatpush2.msra.mxu0 0.0
  %104 = vmatprep.subr.mxu0 0.0
  %105 = vmatpush2.msra.mxu0 0.0
  %106 = vmatprep.subr.mxu0 0.0
  %107 = vmatpush2.msra.mxu0 0.0
  %108 = vmatprep.subr.mxu0 0.0
  %109 = vmatpush2.msra.mxu0 0.0
  %110 = vmatprep.subr.mxu0 0.0
  %111 = vmatpush2.msra.mxu0 0.0
  %112 = vmatprep.subr.mxu0 0.0
  %113 = vmatpush2.msra.mxu0 0.0
  %114 = vmatprep.subr.mxu0 0.0
  %115 = vmatpush2.msra.mxu0 0.0
  %116 = vmatprep.subr.mxu0 0.0
  %117 = vmatpush2.msra.mxu0 0.0
  %118 = vmatprep.subr.mxu0 0.0
  %119 = vmatpush2.msra.mxu0 0.0
  %120 = vmatprep.subr.mxu0 0.0
  %121 = vmatpush2.msra.mxu0 0.0
  %122 = vmatprep.mubr.f32.mxu0 0.0
  %123 = vmatmul.mubr.f32.gmra.mxu0 %v33
  %v124 = vpop.f32.mrf.mxu0
  %v125 = vadd.f32 %v56, %v124
  %v126 = vpop.f32.mrf.mxu0
  %127 = vmatprep.mubr.f32.mxu0 0.0
  %128 = vmatmul.mubr.f32.gmra.mxu0 %v34
  %v129 = vpop.f32.mrf.mxu0
  %v130 = vadd.f32 %v56, %v129
  %v131 = vpop.f32.mrf.mxu0
  %132 = vdwg.mxu0
  %v133 = vmax.f32 %v125, 0.0
  %v134 = vmax.f32 %v130, 0.0
  %v135 = vld [vmem:[#allocation2] sm:$0xff]
  %v136 = vld [vmem:[#allocation2 + $0x8] sm:$0xff]
  %v137 = vld [vmem:[%s3] sm:$0xff]
  %v138 = vld [vmem:[%s3 + $0x8] sm:$0xff]
  %v139 = vld [vmem:[%s3 + $0x10] sm:$0xff]
  %v140 = vld [vmem:[%s3 + $0x18] sm:$0xff]
  %v141 = vld [vmem:[%s3 + $0x20] sm:$0xff]
  %v142 = vld [vmem:[%s3 + $0x28] sm:$0xff]
  %v143 = vld [vmem:[%s3 + $0x30] sm:$0xff]
  %v144 = vld [vmem:[%s3 + $0x38] sm:$0xff]
  %v145 = vld [vmem:[%s3 + $0x40] sm:$0xff]
  %v146 = vld [vmem:[%s3 + $0x48] sm:$0xff]
  %v147 = vld [vmem:[%s3 + $0x50] sm:$0xff]
  %v148 = vld [vmem:[%s3 + $0x58] sm:$0xff]
  %v149 = vld [vmem:[%s3 + $0x60] sm:$0xff]
  %v150 = vld [vmem:[%s3 + $0x68] sm:$0xff]
  %v151 = vld [vmem:[%s3 + $0x70] sm:$0xff]
  %v152 = vld [vmem:[%s3 + $0x78] sm:$0xff]
  %153 = vmatprep.subr.mxu0 0.0
  %154 = vmatpush1.msra.mxu0 %v152
  %155 = vmatprep.subr.mxu0 0.0
  %156 = vmatpush1.msra.mxu0 %v151
  %157 = vmatprep.subr.mxu0 0.0
  %158 = vmatpush1.msra.mxu0 %v150
  %159 = vmatprep.subr.mxu0 0.0
  %160 = vmatpush1.msra.mxu0 %v149
  %161 = vmatprep.subr.mxu0 0.0
  %162 = vmatpush1.msra.mxu0 %v148
  %163 = vmatprep.subr.mxu0 0.0
  %164 = vmatpush1.msra.mxu0 %v147
  %165 = vmatprep.subr.mxu0 0.0
  %166 = vmatpush1.msra.mxu0 %v146
  %167 = vmatprep.subr.mxu0 0.0
  %168 = vmatpush1.msra.mxu0 %v145
  %169 = vmatprep.subr.mxu0 0.0
  %170 = vmatpush1.msra.mxu0 %v144
  %171 = vmatprep.subr.mxu0 0.0
  %172 = vmatpush1.msra.mxu0 %v143
  %173 = vmatprep.subr.mxu0 0.0
  %174 = vmatpush1.msra.mxu0 %v142
  %175 = vmatprep.subr.mxu0 0.0
  %176 = vmatpush1.msra.mxu0 %v141
  %177 = vmatprep.subr.mxu0 0.0
  %178 = vmatpush1.msra.mxu0 %v140
  %179 = vmatprep.subr.mxu0 0.0
  %180 = vmatpush1.msra.mxu0 %v139
  %181 = vmatprep.subr.mxu0 0.0
  %182 = vmatpush1.msra.mxu0 %v138
  %183 = vmatprep.subr.mxu0 0.0
  %184 = vmatpush1.msra.mxu0 %v137
  %185 = vmatprep.subr.mxu0 0.0
  %186 = vmatpush2.msra.mxu0 0.0
  %187 = vmatprep.subr.mxu0 0.0
  %188 = vmatpush2.msra.mxu0 0.0
  %189 = vmatprep.subr.mxu0 0.0
  %190 = vmatpush2.msra.mxu0 0.0
  %191 = vmatprep.subr.mxu0 0.0
  %192 = vmatpush2.msra.mxu0 0.0
  %193 = vmatprep.subr.mxu0 0.0
  %194 = vmatpush2.msra.mxu0 0.0
  %195 = vmatprep.subr.mxu0 0.0
  %196 = vmatpush2.msra.mxu0 0.0
  %197 = vmatprep.subr.mxu0 0.0
  %198 = vmatpush2.msra.mxu0 0.0
  %199 = vmatprep.subr.mxu0 0.0
  %200 = vmatpush2.msra.mxu0 0.0
  %201 = vmatprep.subr.mxu0 0.0
  %202 = vmatpush2.msra.mxu0 0.0
  %203 = vmatprep.subr.mxu0 0.0
  %204 = vmatpush2.msra.mxu0 0.0
  %205 = vmatprep.subr.mxu0 0.0
  %206 = vmatpush2.msra.mxu0 0.0
  %207 = vmatprep.subr.mxu0 0.0
  %208 = vmatpush2.msra.mxu0 0.0
  %209 = vmatprep.subr.mxu0 0.0
  %210 = vmatpush2.msra.mxu0 0.0
  %211 = vmatprep.subr.mxu0 0.0
  %212 = vmatpush2.msra.mxu0 0.0
  %213 = vmatprep.subr.mxu0 0.0
  %214 = vmatpush2.msra.mxu0 0.0
  %215 = vmatprep.subr.mxu0 0.0
  %216 = vmatpush2.msra.mxu0 0.0
  %217 = vmatprep.mubr.f32.mxu0 0.0
  %218 = vmatmul.mubr.f32.gmra.mxu0 %v133
  %v219 = vpop.f32.mrf.mxu0
  %v220 = vadd.f32 0.0, %v219
  %v221 = vpop.f32.mrf.mxu0
  %222 = vmatprep.mubr.f32.mxu0 0.0
  %223 = vmatmul.mubr.f32.gmra.mxu0 %v134
  %v224 = vpop.f32.mrf.mxu0
  %v225 = vadd.f32 0.0, %v224
  %v226 = vpop.f32.mrf.mxu0
  %227 = vdwg.mxu0
  %v228 = vadd.f32 %v135, %v220
  %v229 = vadd.f32 %v136, %v225
  %230 = vst [vmem:[#allocation2] sm:$0xff] %v228
  %231 = vst [vmem:[#allocation2 + $0x8] sm:$0xff] %v229
  // Predicated region
  $region26: #{positionwise_feed_forward.1} parent=0 // pred_check
    %p232 = pneg %p20
  $region27: #{positionwise_feed_forward.1} parent=0 // pred_check_branch
    %234 = sbr.rel (%p232) target = $region29
  $region28: #{positionwise_feed_forward.1} parent=0 // pred_region
    %v235 = vld [vmem:[#allocation2] sm:$0xff]
    %v236 = vld [vmem:[#allocation2 + $0x8] sm:$0xff]
    %237 = vst [vmem:[%s5] sm:$0xff] %v235
    %238 = vst [vmem:[%s5 + $0x8] sm:$0xff] %v236
  $region29: #{positionwise_feed_forward.1} parent=0 // pred_fallthru
    _
  // Predicated region
  $region30: #{positionwise_feed_forward.1} parent=0 // pred_check
    _
  $region31: #{positionwise_feed_forward.1} parent=0 // pred_check_branch
    %240 = sbr.rel (0) target = $region33
  $region32: #{positionwise_feed_forward.1} parent=0 // pred_region
    _
  $region33: #{positionwise_feed_forward.1} parent=0 // pred_fallthru
    _
  // Predicated region
  $region34: #{positionwise_feed_forward.1} parent=0 // pred_check
    _
  $region35: #{positionwise_feed_forward.1} parent=0 // pred_check_branch
    %242 = sbr.rel (0) target = $region37
  $region36: #{positionwise_feed_forward.1} parent=0 // pred_region
    _
  $region37: #{positionwise_feed_forward.1} parent=0 // pred_fallthru
    _

</llo_original>
